<compile_context>
chip_gen: v5e
topology: v5e:2x2
jax: 0.10.0
libtpu: 0.0.40
codegen_flags: <defaults>
</compile_context>

<pallas_src>
import jax
import jax.numpy as jnp
from jax.experimental import pallas as pl
from jax.experimental.pallas import tpu as pltpu

# Deterministic "parameters" from ComboLoss.__init__ / DiceLoss.__init__
BCE_WT = 0.5
POS_WT = 10.0
SMOOTH = 1e-08

_LANES = 128
_STRIP_ROWS = 32                      # 32 sublanes: safe tile multiple for f32/bf16/int8
_CHUNK = _STRIP_ROWS * _LANES         # 4096 elements per strip
_MAX_STRIPS_PER_BLOCK = 128           # 4096 rows -> 2 MiB f32 per input per buffer


def _make_combo_kernel(strips_per_block, n_valid_strips):
    """Kernel computing per-block partial sums (bce, p*t, p, t) as (8,128) vregs."""

    def kernel(x_ref, t_ref, out_ref):
        base_strip = pl.program_id(0) * strips_per_block

        def fold(v):
            # (32,128) -> (8,128): leading-dim split reshape + VPU adds (no XLU).
            return jnp.sum(v.reshape(_STRIP_ROWS // 8, 8, _LANES), axis=0)

        def body(s, carry):
            acc_bce, acc_pt, acc_p, acc_t = carry
            x = x_ref[s].astype(jnp.float32)          # (32,128)
            t = t_ref[s].astype(jnp.float32)

            # One exp per element, reused for softplus AND sigmoid.
            e = jnp.exp(-jnp.abs(x))                  # exp(-|x|) in (0,1]
            sp_pos = jnp.maximum(x, 0.0) + jnp.log1p(e)      # softplus(x)
            # BCEWithLogits(pos_weight): softplus(-x) folded out algebraically.
            bce = sp_pos * (1.0 + (POS_WT - 1.0) * t) - POS_WT * (t * x)
            # sigmoid(x) from e using one approx EUP reciprocal.
            inv = pl.reciprocal(1.0 + e, approx=True)
            p = jnp.where(x >= 0.0, inv, e * inv)

            # Per-strip validity mask for the ragged last grid block.  A select
            # (not a multiply) so stale-VMEM garbage / NaNs cannot leak in.
            valid = (base_strip + s) < n_valid_strips

            def mfold(v):
                return jnp.where(valid, fold(v), 0.0)

            return (acc_bce + mfold(bce),
                    acc_pt + mfold(p * t),
                    acc_p + mfold(p),
                    acc_t + mfold(t))

        zeros = jnp.zeros((8, _LANES), jnp.float32)
        acc_bce, acc_pt, acc_p, acc_t = jax.lax.fori_loop(
            0, strips_per_block, body, (zeros, zeros, zeros, zeros),
            unroll=min(strips_per_block, 8))

        out_ref[0, 0] = acc_bce      # sum of weighted BCE terms
        out_ref[0, 1] = acc_pt       # dice intersection
        out_ref[0, 2] = acc_p        # sum(sigmoid)
        out_ref[0, 3] = acc_t        # sum(target)

    return kernel


def _partial_sums_flat(x, t):
    """Exact partial sums (bce, p*t, p, t) for a tiny (<4096-element) tail."""
    x = x.astype(jnp.float32)
    t = t.astype(jnp.float32)
    e = jnp.exp(-jnp.abs(x))
    sp_pos = jnp.maximum(x, 0.0) + jnp.log1p(e)
    bce = sp_pos * (1.0 + (POS_WT - 1.0) * t) - POS_WT * (t * x)
    p = jax.nn.sigmoid(x)
    return jnp.stack([jnp.sum(bce), jnp.sum(p * t), jnp.sum(p), jnp.sum(t)])


def combo_loss(logits, targets):
    """Pallas ComboLoss.  logits/targets: any shape (NCHW expected), any dtype
    castable to f32 (f32 / bf16 logits, f32 / int8 targets).  Returns scalar f32."""
    total_n = logits.size
    assert targets.size == total_n

    m = (total_n // _CHUNK) * _CHUNK          # elements handled by the kernel
    rem = total_n - m                         # <4096-element tail, plain JAX

    if rem:
        xf = jnp.reshape(logits, (-1,))
        tf = jnp.reshape(targets, (-1,))

    sums = jnp.zeros((4,), jnp.float32)

    if m > 0:
        n_strips = m // _CHUNK
        if rem:
            x3d = jnp.reshape(xf[:m], (n_strips, _STRIP_ROWS, _LANES))
            t3d = jnp.reshape(tf[:m], (n_strips, _STRIP_ROWS, _LANES))
        else:
            x3d = jnp.reshape(logits, (n_strips, _STRIP_ROWS, _LANES))
            t3d = jnp.reshape(targets, (n_strips, _STRIP_ROWS, _LANES))

        # Block sizing: biggest power-of-two strip count that (a) leaves >=2
        # grid blocks whenever possible (v7x has 2 TensorCores) and (b) wastes
        # <~25% of the grid on the masked ragged tail block.
        spb = _MAX_STRIPS_PER_BLOCK
        while spb > 1 and spb >= n_strips:
            spb //= 2
        while spb > 1 and (pl.cdiv(n_strips, spb) * spb - n_strips) * 4 > n_strips:
            spb //= 2
        num_blocks = pl.cdiv(n_strips, spb)

        out_bytes = num_blocks * 4 * 8 * _LANES * 4
        cost = pl.CostEstimate(
            flops=24 * m,
            transcendentals=3 * m,
            bytes_accessed=m * (x3d.dtype.itemsize + t3d.dtype.itemsize) + out_bytes,
        )

        partials = pl.pallas_call(
            _make_combo_kernel(spb, n_strips),
            out_shape=jax.ShapeDtypeStruct((num_blocks, 4, 8, _LANES), jnp.float32),
            grid_spec=pltpu.PrefetchScalarGridSpec(
                num_scalar_prefetch=0,
                grid=(num_blocks,),
                in_specs=[
                    pl.BlockSpec((spb, _STRIP_ROWS, _LANES), lambda i: (i, 0, 0)),
                    pl.BlockSpec((spb, _STRIP_ROWS, _LANES), lambda i: (i, 0, 0)),
                ],
                out_specs=pl.BlockSpec((1, 4, 8, _LANES), lambda i: (i, 0, 0, 0)),
            ),
            compiler_params=pltpu.CompilerParams(
                dimension_semantics=("parallel",)),
            cost_estimate=cost,
        )(x3d, t3d)

        sums = sums + jnp.sum(partials, axis=(0, 2, 3))      # (4,) f32

    if rem:
        sums = sums + _partial_sums_flat(xf[m:], tf[m:])

    bce_loss = sums[0] / jnp.float32(total_n)
    dice = (2.0 * sums[1] + SMOOTH) / (sums[2] + sums[3] + SMOOTH)
    dice_loss = 1.0 - dice
    return BCE_WT * bce_loss + (1.0 - BCE_WT) * dice_loss


def _reference_combo_loss(logits, targets):
    """Pure-JAX reference mirroring the PyTorch module (exact sigmoid)."""
    x = logits.astype(jnp.float32).reshape(-1)
    t = targets.astype(jnp.float32).reshape(-1)
    log1p_term = jnp.log1p(jnp.exp(-jnp.abs(x)))
    sp_pos = jnp.maximum(x, 0.0) + log1p_term
    sp_neg = jnp.maximum(-x, 0.0) + log1p_term
    bce = jnp.mean(POS_WT * t * sp_neg + (1.0 - t) * sp_pos)
    p = jax.nn.sigmoid(x)
    dice = (2.0 * jnp.sum(p * t) + SMOOTH) / (jnp.sum(p) + jnp.sum(t) + SMOOTH)
    return BCE_WT * bce + (1.0 - BCE_WT) * (1.0 - dice)


if __name__ == "__main__":
    key = jax.random.PRNGKey(0)
    k1, k2, k3, k4 = jax.random.split(key, 4)

    # 1) NCHW, size an exact multiple of the 4096-element chunk -> kernel only,
    #    multiple grid blocks (both v7x TCs used), no tail.
    lg = jax.random.normal(k1, (2, 4, 64, 64), dtype=jnp.float32) * 2.0
    tg = jax.random.bernoulli(k2, p=0.3, shape=(2, 4, 64, 64)).astype(jnp.float32)

    # 2) Awkward size -> ragged (masked) last grid block + small pure-JAX tail.
    lg2 = jax.random.normal(k3, (2, 4, 67, 59), dtype=jnp.float32) * 2.0
    tg2 = jax.random.bernoulli(k4, p=0.3, shape=(2, 4, 67, 59)).astype(jnp.float32)

    # 3) Narrow input dtypes (bf16 logits, int8 targets): the roofline-friendly path.
    cases = [(lg, tg), (lg2, tg2), (lg.astype(jnp.bfloat16), tg.astype(jnp.int8))]

    for lgt, tgt in cases:
        loss = jax.block_until_ready(combo_loss(lgt, tgt))
        ref = jax.block_until_ready(_reference_combo_loss(lgt, tgt))
        # Approx EUP reciprocal in the kernel's sigmoid + per-block accumulation
        # order -> ~1e-3-level differences; tolerance loosened accordingly.
        assert jnp.allclose(loss, ref, rtol=5e-3, atol=5e-3), (
            lgt.shape, str(lgt.dtype), float(loss), float(ref))

    print("KERNEL_OK")
</pallas_src>

<mosaic_0001>
module attributes {stable_mosaic.version = 11 : i64} {
  func.func @kernel(%arg0: i32, %arg1: memref<4x32x128xf32, #tpu.memory_space<vmem>>, %arg2: memref<4x32x128xf32, #tpu.memory_space<vmem>>, %arg3: memref<1x4x8x128xf32, #tpu.memory_space<vmem>>) attributes {dimension_semantics = [#tpu.dimension_semantics<parallel>], iteration_bounds = array<i64: 2>, scalar_prefetch = 0 : i64, scratch_operands = 0 : i64, tpu.core_type = #tpu.core_type<tc>, window_params = [{transform_indices = @transform_0, window_bounds = array<i64: 4, 32, 128>}, {transform_indices = @transform_1, window_bounds = array<i64: 4, 32, 128>}, {transform_indices = @transform_2, window_bounds = array<i64: 1, 4, 8, 128>}]} {
    %c4_i32 = arith.constant 4 : i32
    %0 = arith.muli %arg0, %c4_i32 : i32
    %cst = arith.constant 0.000000e+00 : f32
    %1 = vector.broadcast %cst : f32 to vector<8x128xf32>
    %c0_i32 = arith.constant 0 : i32
    %2 = arith.index_cast %c0_i32 : i32 to index
    %c0 = arith.constant 0 : index
    %c0_0 = arith.constant 0 : index
    %3 = vector.load %arg1[%2, %c0, %c0_0] : memref<4x32x128xf32, #tpu.memory_space<vmem>>, vector<1x32x128xf32>
    %4 = vector.shape_cast %3 : vector<1x32x128xf32> to vector<32x128xf32>
    %5 = arith.index_cast %c0_i32 : i32 to index
    %c0_1 = arith.constant 0 : index
    %c0_2 = arith.constant 0 : index
    %6 = vector.load %arg2[%5, %c0_1, %c0_2] : memref<4x32x128xf32, #tpu.memory_space<vmem>>, vector<1x32x128xf32>
    %7 = vector.shape_cast %6 : vector<1x32x128xf32> to vector<32x128xf32>
    %8 = math.absf %4 : vector<32x128xf32>
    %cst_3 = arith.constant 0.000000e+00 : f32
    %9 = vector.broadcast %cst_3 : f32 to vector<32x128xf32>
    %10 = arith.subf %9, %8 : vector<32x128xf32>
    %11 = math.exp %10 : vector<32x128xf32>
    %cst_4 = arith.constant 0.000000e+00 : f32
    %12 = vector.broadcast %cst_4 : f32 to vector<32x128xf32>
    %13 = arith.maximumf %4, %12 : vector<32x128xf32>
    %14 = math.log1p %11 : vector<32x128xf32>
    %15 = arith.addf %13, %14 : vector<32x128xf32>
    %cst_5 = arith.constant 9.000000e+00 : f32
    %16 = vector.broadcast %cst_5 : f32 to vector<32x128xf32>
    %17 = arith.mulf %16, %7 : vector<32x128xf32>
    %cst_6 = arith.constant 1.000000e+00 : f32
    %18 = vector.broadcast %cst_6 : f32 to vector<32x128xf32>
    %19 = arith.addf %18, %17 : vector<32x128xf32>
    %20 = arith.mulf %15, %19 : vector<32x128xf32>
    %21 = arith.mulf %7, %4 : vector<32x128xf32>
    %cst_7 = arith.constant 1.000000e+01 : f32
    %22 = vector.broadcast %cst_7 : f32 to vector<32x128xf32>
    %23 = arith.mulf %22, %21 : vector<32x128xf32>
    %24 = arith.subf %20, %23 : vector<32x128xf32>
    %cst_8 = arith.constant 1.000000e+00 : f32
    %25 = vector.broadcast %cst_8 : f32 to vector<32x128xf32>
    %26 = arith.addf %25, %11 : vector<32x128xf32>
    %27 = tpu.reciprocal %26 {approx = true} : vector<32x128xf32> -> vector<32x128xf32>
    %cst_9 = arith.constant 0.000000e+00 : f32
    %28 = vector.broadcast %cst_9 : f32 to vector<32x128xf32>
    %29 = arith.cmpf oge, %4, %28 : vector<32x128xf32>
    %30 = arith.mulf %11, %27 : vector<32x128xf32>
    %31 = arith.select %29, %27, %30 : vector<32x128xi1>, vector<32x128xf32>
    %32 = arith.addi %0, %c0_i32 : i32
    %c8_i32 = arith.constant 8 : i32
    %33 = arith.cmpi slt, %32, %c8_i32 : i32
    %34 = vector.shape_cast %24 : vector<32x128xf32> to vector<4x8x128xf32>
    %cst_10 = arith.constant dense<0.000000e+00> : vector<8x128xf32>
    %35 = vector.multi_reduction <add>, %34, %cst_10 [0] : vector<4x8x128xf32> to vector<8x128xf32>
    %cst_11 = arith.constant 0.000000e+00 : f32
    %36 = vector.broadcast %cst_11 : f32 to vector<8x128xf32>
    %37 = arith.select %33, %35, %36 : vector<8x128xf32>
    %38 = arith.addf %1, %37 : vector<8x128xf32>
    %39 = arith.mulf %31, %7 : vector<32x128xf32>
    %40 = vector.shape_cast %39 : vector<32x128xf32> to vector<4x8x128xf32>
    %cst_12 = arith.constant dense<0.000000e+00> : vector<8x128xf32>
    %41 = vector.multi_reduction <add>, %40, %cst_12 [0] : vector<4x8x128xf32> to vector<8x128xf32>
    %cst_13 = arith.constant 0.000000e+00 : f32
    %42 = vector.broadcast %cst_13 : f32 to vector<8x128xf32>
    %43 = arith.select %33, %41, %42 : vector<8x128xf32>
    %44 = arith.addf %1, %43 : vector<8x128xf32>
    %45 = vector.shape_cast %31 : vector<32x128xf32> to vector<4x8x128xf32>
    %cst_14 = arith.constant dense<0.000000e+00> : vector<8x128xf32>
    %46 = vector.multi_reduction <add>, %45, %cst_14 [0] : vector<4x8x128xf32> to vector<8x128xf32>
    %cst_15 = arith.constant 0.000000e+00 : f32
    %47 = vector.broadcast %cst_15 : f32 to vector<8x128xf32>
    %48 = arith.select %33, %46, %47 : vector<8x128xf32>
    %49 = arith.addf %1, %48 : vector<8x128xf32>
    %50 = vector.shape_cast %7 : vector<32x128xf32> to vector<4x8x128xf32>
    %cst_16 = arith.constant dense<0.000000e+00> : vector<8x128xf32>
    %51 = vector.multi_reduction <add>, %50, %cst_16 [0] : vector<4x8x128xf32> to vector<8x128xf32>
    %cst_17 = arith.constant 0.000000e+00 : f32
    %52 = vector.broadcast %cst_17 : f32 to vector<8x128xf32>
    %53 = arith.select %33, %51, %52 : vector<8x128xf32>
    %54 = arith.addf %1, %53 : vector<8x128xf32>
    %c1_i32 = arith.constant 1 : i32
    %55 = arith.index_cast %c1_i32 : i32 to index
    %c0_18 = arith.constant 0 : index
    %c0_19 = arith.constant 0 : index
    %56 = vector.load %arg1[%55, %c0_18, %c0_19] : memref<4x32x128xf32, #tpu.memory_space<vmem>>, vector<1x32x128xf32>
    %57 = vector.shape_cast %56 : vector<1x32x128xf32> to vector<32x128xf32>
    %58 = arith.index_cast %c1_i32 : i32 to index
    %c0_20 = arith.constant 0 : index
    %c0_21 = arith.constant 0 : index
    %59 = vector.load %arg2[%58, %c0_20, %c0_21] : memref<4x32x128xf32, #tpu.memory_space<vmem>>, vector<1x32x128xf32>
    %60 = vector.shape_cast %59 : vector<1x32x128xf32> to vector<32x128xf32>
    %61 = math.absf %57 : vector<32x128xf32>
    %cst_22 = arith.constant 0.000000e+00 : f32
    %62 = vector.broadcast %cst_22 : f32 to vector<32x128xf32>
    %63 = arith.subf %62, %61 : vector<32x128xf32>
    %64 = math.exp %63 : vector<32x128xf32>
    %cst_23 = arith.constant 0.000000e+00 : f32
    %65 = vector.broadcast %cst_23 : f32 to vector<32x128xf32>
    %66 = arith.maximumf %57, %65 : vector<32x128xf32>
    %67 = math.log1p %64 : vector<32x128xf32>
    %68 = arith.addf %66, %67 : vector<32x128xf32>
    %cst_24 = arith.constant 9.000000e+00 : f32
    %69 = vector.broadcast %cst_24 : f32 to vector<32x128xf32>
    %70 = arith.mulf %69, %60 : vector<32x128xf32>
    %cst_25 = arith.constant 1.000000e+00 : f32
    %71 = vector.broadcast %cst_25 : f32 to vector<32x128xf32>
    %72 = arith.addf %71, %70 : vector<32x128xf32>
    %73 = arith.mulf %68, %72 : vector<32x128xf32>
    %74 = arith.mulf %60, %57 : vector<32x128xf32>
    %cst_26 = arith.constant 1.000000e+01 : f32
    %75 = vector.broadcast %cst_26 : f32 to vector<32x128xf32>
    %76 = arith.mulf %75, %74 : vector<32x128xf32>
    %77 = arith.subf %73, %76 : vector<32x128xf32>
    %cst_27 = arith.constant 1.000000e+00 : f32
    %78 = vector.broadcast %cst_27 : f32 to vector<32x128xf32>
    %79 = arith.addf %78, %64 : vector<32x128xf32>
    %80 = tpu.reciprocal %79 {approx = true} : vector<32x128xf32> -> vector<32x128xf32>
    %cst_28 = arith.constant 0.000000e+00 : f32
    %81 = vector.broadcast %cst_28 : f32 to vector<32x128xf32>
    %82 = arith.cmpf oge, %57, %81 : vector<32x128xf32>
    %83 = arith.mulf %64, %80 : vector<32x128xf32>
    %84 = arith.select %82, %80, %83 : vector<32x128xi1>, vector<32x128xf32>
    %85 = arith.addi %0, %c1_i32 : i32
    %c8_i32_29 = arith.constant 8 : i32
    %86 = arith.cmpi slt, %85, %c8_i32_29 : i32
    %87 = vector.shape_cast %77 : vector<32x128xf32> to vector<4x8x128xf32>
    %cst_30 = arith.constant dense<0.000000e+00> : vector<8x128xf32>
    %88 = vector.multi_reduction <add>, %87, %cst_30 [0] : vector<4x8x128xf32> to vector<8x128xf32>
    %cst_31 = arith.constant 0.000000e+00 : f32
    %89 = vector.broadcast %cst_31 : f32 to vector<8x128xf32>
    %90 = arith.select %86, %88, %89 : vector<8x128xf32>
    %91 = arith.addf %38, %90 : vector<8x128xf32>
    %92 = arith.mulf %84, %60 : vector<32x128xf32>
    %93 = vector.shape_cast %92 : vector<32x128xf32> to vector<4x8x128xf32>
    %cst_32 = arith.constant dense<0.000000e+00> : vector<8x128xf32>
    %94 = vector.multi_reduction <add>, %93, %cst_32 [0] : vector<4x8x128xf32> to vector<8x128xf32>
    %cst_33 = arith.constant 0.000000e+00 : f32
    %95 = vector.broadcast %cst_33 : f32 to vector<8x128xf32>
    %96 = arith.select %86, %94, %95 : vector<8x128xf32>
    %97 = arith.addf %44, %96 : vector<8x128xf32>
    %98 = vector.shape_cast %84 : vector<32x128xf32> to vector<4x8x128xf32>
    %cst_34 = arith.constant dense<0.000000e+00> : vector<8x128xf32>
    %99 = vector.multi_reduction <add>, %98, %cst_34 [0] : vector<4x8x128xf32> to vector<8x128xf32>
    %cst_35 = arith.constant 0.000000e+00 : f32
    %100 = vector.broadcast %cst_35 : f32 to vector<8x128xf32>
    %101 = arith.select %86, %99, %100 : vector<8x128xf32>
    %102 = arith.addf %49, %101 : vector<8x128xf32>
    %103 = vector.shape_cast %60 : vector<32x128xf32> to vector<4x8x128xf32>
    %cst_36 = arith.constant dense<0.000000e+00> : vector<8x128xf32>
    %104 = vector.multi_reduction <add>, %103, %cst_36 [0] : vector<4x8x128xf32> to vector<8x128xf32>
    %cst_37 = arith.constant 0.000000e+00 : f32
    %105 = vector.broadcast %cst_37 : f32 to vector<8x128xf32>
    %106 = arith.select %86, %104, %105 : vector<8x128xf32>
    %107 = arith.addf %54, %106 : vector<8x128xf32>
    %c2_i32 = arith.constant 2 : i32
    %108 = arith.index_cast %c2_i32 : i32 to index
    %c0_38 = arith.constant 0 : index
    %c0_39 = arith.constant 0 : index
    %109 = vector.load %arg1[%108, %c0_38, %c0_39] : memref<4x32x128xf32, #tpu.memory_space<vmem>>, vector<1x32x128xf32>
    %110 = vector.shape_cast %109 : vector<1x32x128xf32> to vector<32x128xf32>
    %111 = arith.index_cast %c2_i32 : i32 to index
    %c0_40 = arith.constant 0 : index
    %c0_41 = arith.constant 0 : index
    %112 = vector.load %arg2[%111, %c0_40, %c0_41] : memref<4x32x128xf32, #tpu.memory_space<vmem>>, vector<1x32x128xf32>
    %113 = vector.shape_cast %112 : vector<1x32x128xf32> to vector<32x128xf32>
    %114 = math.absf %110 : vector<32x128xf32>
    %cst_42 = arith.constant 0.000000e+00 : f32
    %115 = vector.broadcast %cst_42 : f32 to vector<32x128xf32>
    %116 = arith.subf %115, %114 : vector<32x128xf32>
    %117 = math.exp %116 : vector<32x128xf32>
    %cst_43 = arith.constant 0.000000e+00 : f32
    %118 = vector.broadcast %cst_43 : f32 to vector<32x128xf32>
    %119 = arith.maximumf %110, %118 : vector<32x128xf32>
    %120 = math.log1p %117 : vector<32x128xf32>
    %121 = arith.addf %119, %120 : vector<32x128xf32>
    %cst_44 = arith.constant 9.000000e+00 : f32
    %122 = vector.broadcast %cst_44 : f32 to vector<32x128xf32>
    %123 = arith.mulf %122, %113 : vector<32x128xf32>
    %cst_45 = arith.constant 1.000000e+00 : f32
    %124 = vector.broadcast %cst_45 : f32 to vector<32x128xf32>
    %125 = arith.addf %124, %123 : vector<32x128xf32>
    %126 = arith.mulf %121, %125 : vector<32x128xf32>
    %127 = arith.mulf %113, %110 : vector<32x128xf32>
    %cst_46 = arith.constant 1.000000e+01 : f32
    %128 = vector.broadcast %cst_46 : f32 to vector<32x128xf32>
    %129 = arith.mulf %128, %127 : vector<32x128xf32>
    %130 = arith.subf %126, %129 : vector<32x128xf32>
    %cst_47 = arith.constant 1.000000e+00 : f32
    %131 = vector.broadcast %cst_47 : f32 to vector<32x128xf32>
    %132 = arith.addf %131, %117 : vector<32x128xf32>
    %133 = tpu.reciprocal %132 {approx = true} : vector<32x128xf32> -> vector<32x128xf32>
    %cst_48 = arith.constant 0.000000e+00 : f32
    %134 = vector.broadcast %cst_48 : f32 to vector<32x128xf32>
    %135 = arith.cmpf oge, %110, %134 : vector<32x128xf32>
    %136 = arith.mulf %117, %133 : vector<32x128xf32>
    %137 = arith.select %135, %133, %136 : vector<32x128xi1>, vector<32x128xf32>
    %138 = arith.addi %0, %c2_i32 : i32
    %c8_i32_49 = arith.constant 8 : i32
    %139 = arith.cmpi slt, %138, %c8_i32_49 : i32
    %140 = vector.shape_cast %130 : vector<32x128xf32> to vector<4x8x128xf32>
    %cst_50 = arith.constant dense<0.000000e+00> : vector<8x128xf32>
    %141 = vector.multi_reduction <add>, %140, %cst_50 [0] : vector<4x8x128xf32> to vector<8x128xf32>
    %cst_51 = arith.constant 0.000000e+00 : f32
    %142 = vector.broadcast %cst_51 : f32 to vector<8x128xf32>
    %143 = arith.select %139, %141, %142 : vector<8x128xf32>
    %144 = arith.addf %91, %143 : vector<8x128xf32>
    %145 = arith.mulf %137, %113 : vector<32x128xf32>
    %146 = vector.shape_cast %145 : vector<32x128xf32> to vector<4x8x128xf32>
    %cst_52 = arith.constant dense<0.000000e+00> : vector<8x128xf32>
    %147 = vector.multi_reduction <add>, %146, %cst_52 [0] : vector<4x8x128xf32> to vector<8x128xf32>
    %cst_53 = arith.constant 0.000000e+00 : f32
    %148 = vector.broadcast %cst_53 : f32 to vector<8x128xf32>
    %149 = arith.select %139, %147, %148 : vector<8x128xf32>
    %150 = arith.addf %97, %149 : vector<8x128xf32>
    %151 = vector.shape_cast %137 : vector<32x128xf32> to vector<4x8x128xf32>
    %cst_54 = arith.constant dense<0.000000e+00> : vector<8x128xf32>
    %152 = vector.multi_reduction <add>, %151, %cst_54 [0] : vector<4x8x128xf32> to vector<8x128xf32>
    %cst_55 = arith.constant 0.000000e+00 : f32
    %153 = vector.broadcast %cst_55 : f32 to vector<8x128xf32>
    %154 = arith.select %139, %152, %153 : vector<8x128xf32>
    %155 = arith.addf %102, %154 : vector<8x128xf32>
    %156 = vector.shape_cast %113 : vector<32x128xf32> to vector<4x8x128xf32>
    %cst_56 = arith.constant dense<0.000000e+00> : vector<8x128xf32>
    %157 = vector.multi_reduction <add>, %156, %cst_56 [0] : vector<4x8x128xf32> to vector<8x128xf32>
    %cst_57 = arith.constant 0.000000e+00 : f32
    %158 = vector.broadcast %cst_57 : f32 to vector<8x128xf32>
    %159 = arith.select %139, %157, %158 : vector<8x128xf32>
    %160 = arith.addf %107, %159 : vector<8x128xf32>
    %c3_i32 = arith.constant 3 : i32
    %161 = arith.index_cast %c3_i32 : i32 to index
    %c0_58 = arith.constant 0 : index
    %c0_59 = arith.constant 0 : index
    %162 = vector.load %arg1[%161, %c0_58, %c0_59] : memref<4x32x128xf32, #tpu.memory_space<vmem>>, vector<1x32x128xf32>
    %163 = vector.shape_cast %162 : vector<1x32x128xf32> to vector<32x128xf32>
    %164 = arith.index_cast %c3_i32 : i32 to index
    %c0_60 = arith.constant 0 : index
    %c0_61 = arith.constant 0 : index
    %165 = vector.load %arg2[%164, %c0_60, %c0_61] : memref<4x32x128xf32, #tpu.memory_space<vmem>>, vector<1x32x128xf32>
    %166 = vector.shape_cast %165 : vector<1x32x128xf32> to vector<32x128xf32>
    %167 = math.absf %163 : vector<32x128xf32>
    %cst_62 = arith.constant 0.000000e+00 : f32
    %168 = vector.broadcast %cst_62 : f32 to vector<32x128xf32>
    %169 = arith.subf %168, %167 : vector<32x128xf32>
    %170 = math.exp %169 : vector<32x128xf32>
    %cst_63 = arith.constant 0.000000e+00 : f32
    %171 = vector.broadcast %cst_63 : f32 to vector<32x128xf32>
    %172 = arith.maximumf %163, %171 : vector<32x128xf32>
    %173 = math.log1p %170 : vector<32x128xf32>
    %174 = arith.addf %172, %173 : vector<32x128xf32>
    %cst_64 = arith.constant 9.000000e+00 : f32
    %175 = vector.broadcast %cst_64 : f32 to vector<32x128xf32>
    %176 = arith.mulf %175, %166 : vector<32x128xf32>
    %cst_65 = arith.constant 1.000000e+00 : f32
    %177 = vector.broadcast %cst_65 : f32 to vector<32x128xf32>
    %178 = arith.addf %177, %176 : vector<32x128xf32>
    %179 = arith.mulf %174, %178 : vector<32x128xf32>
    %180 = arith.mulf %166, %163 : vector<32x128xf32>
    %cst_66 = arith.constant 1.000000e+01 : f32
    %181 = vector.broadcast %cst_66 : f32 to vector<32x128xf32>
    %182 = arith.mulf %181, %180 : vector<32x128xf32>
    %183 = arith.subf %179, %182 : vector<32x128xf32>
    %cst_67 = arith.constant 1.000000e+00 : f32
    %184 = vector.broadcast %cst_67 : f32 to vector<32x128xf32>
    %185 = arith.addf %184, %170 : vector<32x128xf32>
    %186 = tpu.reciprocal %185 {approx = true} : vector<32x128xf32> -> vector<32x128xf32>
    %cst_68 = arith.constant 0.000000e+00 : f32
    %187 = vector.broadcast %cst_68 : f32 to vector<32x128xf32>
    %188 = arith.cmpf oge, %163, %187 : vector<32x128xf32>
    %189 = arith.mulf %170, %186 : vector<32x128xf32>
    %190 = arith.select %188, %186, %189 : vector<32x128xi1>, vector<32x128xf32>
    %191 = arith.addi %0, %c3_i32 : i32
    %c8_i32_69 = arith.constant 8 : i32
    %192 = arith.cmpi slt, %191, %c8_i32_69 : i32
    %193 = vector.shape_cast %183 : vector<32x128xf32> to vector<4x8x128xf32>
    %cst_70 = arith.constant dense<0.000000e+00> : vector<8x128xf32>
    %194 = vector.multi_reduction <add>, %193, %cst_70 [0] : vector<4x8x128xf32> to vector<8x128xf32>
    %cst_71 = arith.constant 0.000000e+00 : f32
    %195 = vector.broadcast %cst_71 : f32 to vector<8x128xf32>
    %196 = arith.select %192, %194, %195 : vector<8x128xf32>
    %197 = arith.addf %144, %196 : vector<8x128xf32>
    %198 = arith.mulf %190, %166 : vector<32x128xf32>
    %199 = vector.shape_cast %198 : vector<32x128xf32> to vector<4x8x128xf32>
    %cst_72 = arith.constant dense<0.000000e+00> : vector<8x128xf32>
    %200 = vector.multi_reduction <add>, %199, %cst_72 [0] : vector<4x8x128xf32> to vector<8x128xf32>
    %cst_73 = arith.constant 0.000000e+00 : f32
    %201 = vector.broadcast %cst_73 : f32 to vector<8x128xf32>
    %202 = arith.select %192, %200, %201 : vector<8x128xf32>
    %203 = arith.addf %150, %202 : vector<8x128xf32>
    %204 = vector.shape_cast %190 : vector<32x128xf32> to vector<4x8x128xf32>
    %cst_74 = arith.constant dense<0.000000e+00> : vector<8x128xf32>
    %205 = vector.multi_reduction <add>, %204, %cst_74 [0] : vector<4x8x128xf32> to vector<8x128xf32>
    %cst_75 = arith.constant 0.000000e+00 : f32
    %206 = vector.broadcast %cst_75 : f32 to vector<8x128xf32>
    %207 = arith.select %192, %205, %206 : vector<8x128xf32>
    %208 = arith.addf %155, %207 : vector<8x128xf32>
    %209 = vector.shape_cast %166 : vector<32x128xf32> to vector<4x8x128xf32>
    %cst_76 = arith.constant dense<0.000000e+00> : vector<8x128xf32>
    %210 = vector.multi_reduction <add>, %209, %cst_76 [0] : vector<4x8x128xf32> to vector<8x128xf32>
    %cst_77 = arith.constant 0.000000e+00 : f32
    %211 = vector.broadcast %cst_77 : f32 to vector<8x128xf32>
    %212 = arith.select %192, %210, %211 : vector<8x128xf32>
    %213 = arith.addf %160, %212 : vector<8x128xf32>
    %c4_i32_78 = arith.constant 4 : i32
    %c0_79 = arith.constant 0 : index
    %c0_80 = arith.constant 0 : index
    %c0_81 = arith.constant 0 : index
    %c0_82 = arith.constant 0 : index
    %214 = vector.load %arg3[%c0_79, %c0_80, %c0_81, %c0_82] : memref<1x4x8x128xf32, #tpu.memory_space<vmem>>, vector<1x1x8x128xf32>
    %215 = vector.shape_cast %214 : vector<1x1x8x128xf32> to vector<8x128xf32>
    %216 = vector.shape_cast %197 : vector<8x128xf32> to vector<1x1x8x128xf32>
    tpu.vector_store %arg3[%c0_79, %c0_80, %c0_81, %c0_82], %216 {strides = array<i32>} : memref<1x4x8x128xf32, #tpu.memory_space<vmem>>, vector<1x1x8x128xf32>,
    %c0_83 = arith.constant 0 : index
    %c1 = arith.constant 1 : index
    %c0_84 = arith.constant 0 : index
    %c0_85 = arith.constant 0 : index
    %217 = vector.load %arg3[%c0_83, %c1, %c0_84, %c0_85] : memref<1x4x8x128xf32, #tpu.memory_space<vmem>>, vector<1x1x8x128xf32>
    %218 = vector.shape_cast %217 : vector<1x1x8x128xf32> to vector<8x128xf32>
    %219 = vector.shape_cast %203 : vector<8x128xf32> to vector<1x1x8x128xf32>
    tpu.vector_store %arg3[%c0_83, %c1, %c0_84, %c0_85], %219 {strides = array<i32>} : memref<1x4x8x128xf32, #tpu.memory_space<vmem>>, vector<1x1x8x128xf32>,
    %c0_86 = arith.constant 0 : index
    %c2 = arith.constant 2 : index
    %c0_87 = arith.constant 0 : index
    %c0_88 = arith.constant 0 : index
    %220 = vector.load %arg3[%c0_86, %c2, %c0_87, %c0_88] : memref<1x4x8x128xf32, #tpu.memory_space<vmem>>, vector<1x1x8x128xf32>
    %221 = vector.shape_cast %220 : vector<1x1x8x128xf32> to vector<8x128xf32>
    %222 = vector.shape_cast %208 : vector<8x128xf32> to vector<1x1x8x128xf32>
    tpu.vector_store %arg3[%c0_86, %c2, %c0_87, %c0_88], %222 {strides = array<i32>} : memref<1x4x8x128xf32, #tpu.memory_space<vmem>>, vector<1x1x8x128xf32>,
    %c0_89 = arith.constant 0 : index
    %c3 = arith.constant 3 : index
    %c0_90 = arith.constant 0 : index
    %c0_91 = arith.constant 0 : index
    %223 = vector.load %arg3[%c0_89, %c3, %c0_90, %c0_91] : memref<1x4x8x128xf32, #tpu.memory_space<vmem>>, vector<1x1x8x128xf32>
    %224 = vector.shape_cast %223 : vector<1x1x8x128xf32> to vector<8x128xf32>
    %225 = vector.shape_cast %213 : vector<8x128xf32> to vector<1x1x8x128xf32>
    tpu.vector_store %arg3[%c0_89, %c3, %c0_90, %c0_91], %225 {strides = array<i32>} : memref<1x4x8x128xf32, #tpu.memory_space<vmem>>, vector<1x1x8x128xf32>,
    return
  }
  func.func @transform_0(%arg0: i32) -> (i32, i32, i32) {
    %c0_i32 = arith.constant 0 : i32
    %c0_i32_0 = arith.constant 0 : i32
    %c0_i32_1 = arith.constant 0 : i32
    return %arg0, %c0_i32, %c0_i32_0 : i32, i32, i32
  }
  func.func @transform_1(%arg0: i32) -> (i32, i32, i32) {
    %c0_i32 = arith.constant 0 : i32
    %c0_i32_0 = arith.constant 0 : i32
    %c0_i32_1 = arith.constant 0 : i32
    return %arg0, %c0_i32, %c0_i32_0 : i32, i32, i32
  }
  func.func @transform_2(%arg0: i32) -> (i32, i32, i32, i32) {
    %c0_i32 = arith.constant 0 : i32
    %c0_i32_0 = arith.constant 0 : i32
    %c0_i32_1 = arith.constant 0 : i32
    %c0_i32_2 = arith.constant 0 : i32
    return %arg0, %c0_i32, %c0_i32_0, %c0_i32_1 : i32, i32, i32, i32
  }
}

</mosaic_0001>

<llo_original>
// kernel: tpu_custom_call.1
$region0: #{tpu_custom_call.1}
  #allocation0 [shape = 'u32[]', space=smem, size = 0x4, offset = 0x4, fixed_abs, tag = 'smem constant byte address 0x4 - core index']
  #allocation1 [shape = 'u32[72,128]{1,0:T(1,128)}', space=vmem, size = 0x9000, scoped, tag = 'internal scratch']
  %s0 = inlined_call_operand.hbm [shape: f32[8,32,128], index: 0, kind: input, shape index: {}]
  %s1 = inlined_call_operand.hbm [shape: f32[8,32,128], index: 1, kind: input, shape index: {}]
  %s2 = inlined_call_operand.hbm [shape: f32[2,4,8,128], index: 2, kind: output, shape index: {}]
  %s3 = sld [smem:[#allocation0]]
  $region49: #{tpu_custom_call.1} parent=0
    _
  %s5 = ssub.s32 1, %s3
  %s6 = scalar_select 0, %s5, %s3
  $region1: #{tpu_custom_call.1} parent=0
    #allocation2 [shape = 'u8[131072]{0}', space=vmem, size = 0x20000, scoped, tag = 'input window, operand 0']
    #allocation3 [shape = 's32[2]{0}', space=sflag, size = 0x8, scoped, tag = 'scoped memory for tpu_custom_call.1']
    #allocation4 [shape = 's32[2]{0}', space=sflag, size = 0x8, scoped, tag = 'scoped memory for tpu_custom_call.1']
    #allocation5 [shape = 'u8[131072]{0}', space=vmem, size = 0x20000, scoped, tag = 'input window, operand 1']
    #allocation6 [shape = 's32[2]{0}', space=sflag, size = 0x8, scoped, tag = 'scoped memory for tpu_custom_call.1']
    #allocation7 [shape = 'u8[32768]{0}', space=vmem, size = 0x8000, scoped, tag = 'output window, operand 0']
    %7 = vsyncpa [#allocation3], 0
    %s8 = scalar_lea.sflag [#allocation3], 1
    %9 = vsyncpa %s8, 0
    %10 = vsyncpa [#allocation6], 0
    %s11 = scalar_lea.sflag [#allocation6], 1
    %12 = vsyncpa %s11, 0
    %13 = vsyncpa [#allocation4], 0
    %s14 = scalar_lea.sflag [#allocation4], 1
    %15 = vsyncpa %s14, 0
    loop: start=0, step=1, limit=4
    $region2: #{tpu_custom_call.1} parent=1 // loop_pre_header
      _
    $region3: #{tpu_custom_call.1} parent=1 // loop_header
      %s17 = sphi 0, %s21
      %p18 = scmp.ge.s32.totalorder %s17, 4
      %s27 = sphi 0, %s29
      %s30 = sphi 0, %s27
      %s31 = sphi 0, %s30
      %s47 = sphi 0, %s31
      %s53 = sphi 0, %s55
      %s56 = sphi 0, %s53
      %s57 = sphi 0, %s56
      %s73 = sphi 0, %s57
      %s79 = sphi 0, %s81
      %s82 = sphi 0, %s79
      %s83 = sphi 0, %s82
      %s99 = sphi 0, %s83
    $region4: #{tpu_custom_call.1} parent=1 // loop_header_branch
      %20 = sbr.rel (%p18) target = $region8
    $region5: #{tpu_custom_call.1} parent=1 // loop_body
      %s22 = ssub.s32 %s17, 1
      %s23 = ssub.s32 %s17, 2
      %s24 = sadd.s32 %s17, 1
      %s25 = ssub.s32 %s17, %s24
      %p26 = scmp.eq.s32.totalorder %s25, 0
      %s28 = sadd.s32 %s27, 1
      %s29 = scalar_select %p26, %s27, %s28
      %p32 = pneg %p26
      %p33 = scmp.eq.s32.totalorder %s17, 1
      %p34 = por %p32, %p33
      %p35 = scmp.ne.s32.totalorder %s27, %s30
      %p36 = scmp.eq.s32.totalorder %s17, 0
      %p37 = por %p35, %p36
      %p38 = scmp.ne.s32.totalorder %s27, %s30
      %p39 = scmp.eq.s32.totalorder %s22, 1
      %p40 = por %p38, %p39
      %p41 = scmp.ne.s32.totalorder %s30, %s31
      %p42 = scmp.eq.s32.totalorder %s22, 0
      %p43 = por %p41, %p42
      %p44 = scmp.ne.s32.totalorder %s30, %s31
      %p45 = scmp.eq.s32.totalorder %s23, 1
      %p46 = por %p44, %p45
      %p48 = scmp.ne.s32.totalorder %s31, %s47
      %p49 = scmp.eq.s32.totalorder %s23, 0
      %p50 = por %p48, %p49
      %s51 = ssub.s32 %s17, %s24
      %p52 = scmp.eq.s32.totalorder %s51, 0
      %s54 = sadd.s32 %s53, 1
      %s55 = scalar_select %p52, %s53, %s54
      %p58 = pneg %p52
      %p59 = scmp.eq.s32.totalorder %s17, 1
      %p60 = por %p58, %p59
      %p61 = scmp.ne.s32.totalorder %s53, %s56
      %p62 = scmp.eq.s32.totalorder %s17, 0
      %p63 = por %p61, %p62
      %p64 = scmp.ne.s32.totalorder %s53, %s56
      %p65 = scmp.eq.s32.totalorder %s22, 1
      %p66 = por %p64, %p65
      %p67 = scmp.ne.s32.totalorder %s56, %s57
      %p68 = scmp.eq.s32.totalorder %s22, 0
      %p69 = por %p67, %p68
      %p70 = scmp.ne.s32.totalorder %s56, %s57
      %p71 = scmp.eq.s32.totalorder %s23, 1
      %p72 = por %p70, %p71
      %p74 = scmp.ne.s32.totalorder %s57, %s73
      %p75 = scmp.eq.s32.totalorder %s23, 0
      %p76 = por %p74, %p75
      %s77 = ssub.s32 %s17, %s24
      %p78 = scmp.eq.s32.totalorder %s77, 0
      %s80 = sadd.s32 %s79, 1
      %s81 = scalar_select %p78, %s79, %s80
      %p84 = pneg %p78
      %p85 = scmp.eq.s32.totalorder %s17, 1
      %p86 = por %p84, %p85
      %p87 = scmp.ne.s32.totalorder %s79, %s82
      %p88 = scmp.eq.s32.totalorder %s17, 0
      %p89 = por %p87, %p88
      %p90 = scmp.ne.s32.totalorder %s79, %s82
      %p91 = scmp.eq.s32.totalorder %s22, 1
      %p92 = por %p90, %p91
      %p93 = scmp.ne.s32.totalorder %s82, %s83
      %p94 = scmp.eq.s32.totalorder %s22, 0
      %p95 = por %p93, %p94
      %p96 = scmp.ne.s32.totalorder %s82, %s83
      %p97 = scmp.eq.s32.totalorder %s23, 1
      %p98 = por %p96, %p97
      %p100 = scmp.ne.s32.totalorder %s83, %s99
      %p101 = scmp.eq.s32.totalorder %s23, 0
      %p102 = por %p100, %p101
      %p103 = scmp.le.s32.totalorder 1, %s17
      %p104 = scmp.lt.s32.totalorder %s17, 3
      %p105 = pnand %p103, %p104
      %p106 = pneg %p105
      // Predicated region
      $region9: #{tpu_custom_call.1} parent=5 // pred_check
        _
      $region10: #{tpu_custom_call.1} parent=5 // pred_check_branch
        %108 = sbr.rel (%p105) target = $region12
      $region11: #{tpu_custom_call.1} parent=5 // pred_region
        %s109 = ssub.s32 %s17, 1
      $region12: #{tpu_custom_call.1} parent=5 // pred_fallthru
        _
      %p110 = scmp.lt.s32.totalorder %s17, 2
      // Predicated region
      $region13: #{tpu_custom_call.1} parent=5 // pred_check
        %p111 = pneg %p110
      $region14: #{tpu_custom_call.1} parent=5 // pred_check_branch
        %113 = sbr.rel (%p111) target = $region16
      $region15: #{tpu_custom_call.1} parent=5 // pred_region
        // Predicated region
        $region17: #{tpu_custom_call.1} parent=15 // pred_check
          %p114 = pneg %p37
        $region18: #{tpu_custom_call.1} parent=15 // pred_check_branch
          %116 = sbr.rel (%p114) target = $region20
        $region19: #{tpu_custom_call.1} parent=15 // pred_region
          %s117 = sand.u32 %s27, 1
          %s118 = scalar_lea.sflag [#allocation3], %s117
          %s119 = sand.u32 %s27, 1
          %s120 = smul.addr %s119, 128
          %s121 = scalar_lea.vmem [#allocation2], %s120
          %s122 = smul.u32 4, %s17
          %124 = vsyncadd %s118, 0
          %s125 = smul.addr %s122, 4
          %s126 = smul.addr %s125, 8
          %s127 = scalar_lea.hbm %s0, %s126
          %s128 = sshll.u32 %s127, 4
          %s129 = int_to_ptr.hbm [resolvable:$true] %s128
          %s130 = sshll.u32 %s121, 4
          %s131 = int_to_ptr.vmem [resolvable:$true] %s130
          %136 = dma.hbm_to_vmem [thread:$0]  %s129, 2048, %s131, %s118, 128, 128, 8
        $region20: #{tpu_custom_call.1} parent=15 // pred_fallthru
          _
        // Predicated region
        $region21: #{tpu_custom_call.1} parent=15 // pred_check
          %p137 = pneg %p63
        $region22: #{tpu_custom_call.1} parent=15 // pred_check_branch
          %139 = sbr.rel (%p137) target = $region24
        $region23: #{tpu_custom_call.1} parent=15 // pred_region
          %s140 = sand.u32 %s53, 1
          %s141 = scalar_lea.sflag [#allocation6], %s140
          %s142 = sand.u32 %s53, 1
          %s143 = smul.addr %s142, 128
          %s144 = scalar_lea.vmem [#allocation5], %s143
          %s145 = smul.u32 4, %s17
          %147 = vsyncadd %s141, 0
          %s148 = smul.addr %s145, 4
          %s149 = smul.addr %s148, 8
          %s150 = scalar_lea.hbm %s1, %s149
          %s151 = sshll.u32 %s150, 4
          %s152 = int_to_ptr.hbm [resolvable:$true] %s151
          %s153 = sshll.u32 %s144, 4
          %s154 = int_to_ptr.vmem [resolvable:$true] %s153
          %159 = dma.hbm_to_vmem [thread:$0]  %s152, 2048, %s154, %s141, 128, 128, 8
        $region24: #{tpu_custom_call.1} parent=15 // pred_fallthru
          _
      $region16: #{tpu_custom_call.1} parent=5 // pred_fallthru
        _
      %p160 = scmp.le.s32.totalorder 1, %s17
      %p161 = scmp.lt.s32.totalorder %s17, 3
      %p162 = pnand %p160, %p161
      %p163 = pneg %p162
      // Predicated region
      $region25: #{tpu_custom_call.1} parent=5 // pred_check
        _
      $region26: #{tpu_custom_call.1} parent=5 // pred_check_branch
        %165 = sbr.rel (%p162) target = $region28
      $region27: #{tpu_custom_call.1} parent=5 // pred_region
        %s166 = ssub.s32 %s17, 1
        %s167 = sand.u32 %s30, 1
        %s168 = scalar_lea.sflag [#allocation3], %s167
        %s169 = sand.u32 %s30, 1
        %s170 = smul.addr %s169, 128
        %s171 = scalar_lea.vmem [#allocation2], %s170
        // Predicated region
        $region29: #{tpu_custom_call.1} parent=27 // pred_check
          %p172 = pneg %p43
        $region30: #{tpu_custom_call.1} parent=27 // pred_check_branch
          %174 = sbr.rel (%p172) target = $region32
        $region31: #{tpu_custom_call.1} parent=27 // pred_region
          %176 = dma.done %s168, 2048
        $region32: #{tpu_custom_call.1} parent=27 // pred_fallthru
          _
        %s177 = sand.u32 %s56, 1
        %s178 = scalar_lea.sflag [#allocation6], %s177
        %s179 = sand.u32 %s56, 1
        %s180 = smul.addr %s179, 128
        %s181 = scalar_lea.vmem [#allocation5], %s180
        // Predicated region
        $region33: #{tpu_custom_call.1} parent=27 // pred_check
          %p182 = pneg %p69
        $region34: #{tpu_custom_call.1} parent=27 // pred_check_branch
          %184 = sbr.rel (%p182) target = $region36
        $region35: #{tpu_custom_call.1} parent=27 // pred_region
          %186 = dma.done %s178, 2048
        $region36: #{tpu_custom_call.1} parent=27 // pred_fallthru
          _
        %s187 = sand.u32 %s30, 1
        %s188 = scalar_lea.sflag [#allocation3], %s187
        %s189 = sand.u32 %s30, 1
        %s190 = smul.addr %s189, 128
        %s191 = scalar_lea.vmem [#allocation2], %s190
        %p192 = pneg %p43
        %p193 = pneg %p40
        %s194 = sand.u32 %s56, 1
        %s195 = scalar_lea.sflag [#allocation6], %s194
        %s196 = sand.u32 %s56, 1
        %s197 = smul.addr %s196, 128
        %s198 = scalar_lea.vmem [#allocation5], %s197
        %p199 = pneg %p69
        %p200 = pneg %p66
        %p201 = pneg %p95
        %p202 = pneg %p92
        %s203 = sand.u32 %s82, 1
        %s204 = scalar_lea.sflag [#allocation4], %s203
        %s205 = sand.u32 %s82, 1
        %s206 = smul.addr %s205, 32
        %s207 = scalar_lea.vmem [#allocation7], %s206
        %s208 = smul.u32 4, %s22
        %s209 = smul.u32 4, %s22
        %s210 = smul.u32 %s22, 4
        %v211 = vld [vmem:[%s171] sm:$0xff]
        %v212 = vld [vmem:[%s171 + $0x8] sm:$0xff]
        %v213 = vld [vmem:[%s171 + $0x10] sm:$0xff]
        %v214 = vld [vmem:[%s171 + $0x18] sm:$0xff]
        %v215 = vld [vmem:[%s181] sm:$0xff]
        %v216 = vld [vmem:[%s181 + $0x8] sm:$0xff]
        %v217 = vld [vmem:[%s181 + $0x10] sm:$0xff]
        %v218 = vld [vmem:[%s181 + $0x18] sm:$0xff]
        %v219 = vand.u32 2147483647, %v211
        %v220 = vand.u32 2147483647, %v212
        %v221 = vand.u32 2147483647, %v213
        %v222 = vand.u32 2147483647, %v214
        %v223 = vsub.f32 0.0, %v219
        %v224 = vsub.f32 0.0, %v220
        %v225 = vsub.f32 0.0, %v221
        %v226 = vsub.f32 0.0, %v222
        %v227 = vmul.f32 %v223, 1.442695
        %v228 = vpow.pop %v227
        %v229 = vmul.f32 %v224, 1.442695
        %v230 = vpow.pop %v229
        %v231 = vmul.f32 %v225, 1.442695
        %v232 = vpow.pop %v231
        %v233 = vmul.f32 %v226, 1.442695
        %v234 = vpow.pop %v233
        %v235 = vmax.f32 %v211, 0.0
        %v236 = vmax.f32 %v212, 0.0
        %v237 = vmax.f32 %v213, 0.0
        %v238 = vmax.f32 %v214, 0.0
        %v239 = vadd.f32 %v228, 1.0
        %v240 = vlog2.pop %v239
        %v241 = vmul.f32 %v240, 0.6931472
        %v242 = vmul.f32 -0.5, %v228
        %v243 = vadd.f32 %v242, 1.0
        %v244 = vmul.f32 %v243, %v228
        %v245 = vand.u32 2147483647, %v228
        %vm246 = vcmp.lt.f32.partialorder %v245, 0.0004427343
        %v247 = vsel %vm246, %v244, %v241
        %v248 = vadd.f32 %v230, 1.0
        %v249 = vlog2.pop %v248
        %v250 = vmul.f32 %v249, 0.6931472
        %v251 = vmul.f32 -0.5, %v230
        %v252 = vadd.f32 %v251, 1.0
        %v253 = vmul.f32 %v252, %v230
        %v254 = vand.u32 2147483647, %v230
        %vm255 = vcmp.lt.f32.partialorder %v254, 0.0004427343
        %v256 = vsel %vm255, %v253, %v250
        %v257 = vadd.f32 %v232, 1.0
        %v258 = vlog2.pop %v257
        %v259 = vmul.f32 %v258, 0.6931472
        %v260 = vmul.f32 -0.5, %v232
        %v261 = vadd.f32 %v260, 1.0
        %v262 = vmul.f32 %v261, %v232
        %v263 = vand.u32 2147483647, %v232
        %vm264 = vcmp.lt.f32.partialorder %v263, 0.0004427343
        %v265 = vsel %vm264, %v262, %v259
        %v266 = vadd.f32 %v234, 1.0
        %v267 = vlog2.pop %v266
        %v268 = vmul.f32 %v267, 0.6931472
        %v269 = vmul.f32 -0.5, %v234
        %v270 = vadd.f32 %v269, 1.0
        %v271 = vmul.f32 %v270, %v234
        %v272 = vand.u32 2147483647, %v234
        %vm273 = vcmp.lt.f32.partialorder %v272, 0.0004427343
        %v274 = vsel %vm273, %v271, %v268
        %v275 = vadd.f32 %v235, %v247
        %v276 = vadd.f32 %v236, %v256
        %v277 = vadd.f32 %v237, %v265
        %v278 = vadd.f32 %v238, %v274
        %v279 = vmul.f32 %v215, 9.0
        %v280 = vmul.f32 %v216, 9.0
        %v281 = vmul.f32 %v217, 9.0
        %v282 = vmul.f32 %v218, 9.0
        %v283 = vadd.f32 %v279, 1.0
        %v284 = vadd.f32 %v280, 1.0
        %v285 = vadd.f32 %v281, 1.0
        %v286 = vadd.f32 %v282, 1.0
        %v287 = vmul.f32 %v275, %v283
        %v288 = vmul.f32 %v276, %v284
        %v289 = vmul.f32 %v277, %v285
        %v290 = vmul.f32 %v278, %v286
        %v291 = vmul.f32 %v215, %v211
        %v292 = vmul.f32 %v216, %v212
        %v293 = vmul.f32 %v217, %v213
        %v294 = vmul.f32 %v218, %v214
        %v295 = vmul.f32 %v291, 10.0
        %v296 = vmul.f32 %v292, 10.0
        %v297 = vmul.f32 %v293, 10.0
        %v298 = vmul.f32 %v294, 10.0
        %v299 = vsub.f32 %v287, %v295
        %v300 = vsub.f32 %v288, %v296
        %v301 = vsub.f32 %v289, %v297
        %v302 = vsub.f32 %v290, %v298
        %v303 = vadd.f32 %v228, 1.0
        %v304 = vadd.f32 %v230, 1.0
        %v305 = vadd.f32 %v232, 1.0
        %v306 = vadd.f32 %v234, 1.0
        %v307 = vrcp.pop %v303
        %v308 = vrcp.pop %v304
        %v309 = vrcp.pop %v305
        %v310 = vrcp.pop %v306
        %vm311 = vcmp.ge.f32.partialorder %v211, 0.0
        %vm312 = vcmp.ge.f32.partialorder %v212, 0.0
        %vm313 = vcmp.ge.f32.partialorder %v213, 0.0
        %vm314 = vcmp.ge.f32.partialorder %v214, 0.0
        %v315 = vmul.f32 %v228, %v307
        %v316 = vmul.f32 %v230, %v308
        %v317 = vmul.f32 %v232, %v309
        %v318 = vmul.f32 %v234, %v310
        %v319 = vsel %vm311, %v307, %v315
        %v320 = vsel %vm312, %v308, %v316
        %v321 = vsel %vm313, %v309, %v317
        %v322 = vsel %vm314, %v310, %v318
        %p323 = scmp.lt.s32.totalorder %s210, 8
        %v324 = vadd.f32 %v299, %v300
        %v325 = vadd.f32 %v324, %v301
        %v326 = vadd.f32 %v325, %v302
        %s327 = scalar_select %p323, 1, 0
        %v328 = vstv %s327
        %vm329 = vcmp.eq.s32.totalorder %v328, 1
        %v330 = vsel %vm329, %v326, 0.0
        %v331 = vadd.f32 %v330, 0.0
        %v332 = vmul.f32 %v319, %v215
        %v333 = vmul.f32 %v320, %v216
        %v334 = vmul.f32 %v321, %v217
        %v335 = vmul.f32 %v322, %v218
        %v336 = vadd.f32 %v332, %v333
        %v337 = vadd.f32 %v336, %v334
        %v338 = vadd.f32 %v337, %v335
        %v339 = vsel %vm329, %v338, 0.0
        %v340 = vadd.f32 %v339, 0.0
        %v341 = vadd.f32 %v319, %v320
        %v342 = vadd.f32 %v341, %v321
        %v343 = vadd.f32 %v342, %v322
        %v344 = vsel %vm329, %v343, 0.0
        %v345 = vadd.f32 %v344, 0.0
        %v346 = vadd.f32 %v215, %v216
        %v347 = vadd.f32 %v346, %v217
        %v348 = vadd.f32 %v347, %v218
        %v349 = vsel %vm329, %v348, 0.0
        %v350 = vadd.f32 %v349, 0.0
        %s351 = scalar_lea.vmem %s171, 32 [#allocation2]
        %v352 = vld [vmem:[%s351] sm:$0xff]
        %v353 = vld [vmem:[%s351 + $0x8] sm:$0xff]
        %v354 = vld [vmem:[%s351 + $0x10] sm:$0xff]
        %v355 = vld [vmem:[%s351 + $0x18] sm:$0xff]
        %s356 = scalar_lea.vmem %s181, 32 [#allocation5]
        %v357 = vld [vmem:[%s356] sm:$0xff]
        %v358 = vld [vmem:[%s356 + $0x8] sm:$0xff]
        %v359 = vld [vmem:[%s356 + $0x10] sm:$0xff]
        %v360 = vld [vmem:[%s356 + $0x18] sm:$0xff]
        %v361 = vand.u32 2147483647, %v352
        %v362 = vand.u32 2147483647, %v353
        %v363 = vand.u32 2147483647, %v354
        %v364 = vand.u32 2147483647, %v355
        %v365 = vsub.f32 0.0, %v361
        %v366 = vsub.f32 0.0, %v362
        %v367 = vsub.f32 0.0, %v363
        %v368 = vsub.f32 0.0, %v364
        %v369 = vmul.f32 %v365, 1.442695
        %v370 = vpow.pop %v369
        %v371 = vmul.f32 %v366, 1.442695
        %v372 = vpow.pop %v371
        %v373 = vmul.f32 %v367, 1.442695
        %v374 = vpow.pop %v373
        %v375 = vmul.f32 %v368, 1.442695
        %v376 = vpow.pop %v375
        %v377 = vmax.f32 %v352, 0.0
        %v378 = vmax.f32 %v353, 0.0
        %v379 = vmax.f32 %v354, 0.0
        %v380 = vmax.f32 %v355, 0.0
        %v381 = vadd.f32 %v370, 1.0
        %v382 = vlog2.pop %v381
        %v383 = vmul.f32 %v382, 0.6931472
        %v384 = vmul.f32 -0.5, %v370
        %v385 = vadd.f32 %v384, 1.0
        %v386 = vmul.f32 %v385, %v370
        %v387 = vand.u32 2147483647, %v370
        %vm388 = vcmp.lt.f32.partialorder %v387, 0.0004427343
        %v389 = vsel %vm388, %v386, %v383
        %v390 = vadd.f32 %v372, 1.0
        %v391 = vlog2.pop %v390
        %v392 = vmul.f32 %v391, 0.6931472
        %v393 = vmul.f32 -0.5, %v372
        %v394 = vadd.f32 %v393, 1.0
        %v395 = vmul.f32 %v394, %v372
        %v396 = vand.u32 2147483647, %v372
        %vm397 = vcmp.lt.f32.partialorder %v396, 0.0004427343
        %v398 = vsel %vm397, %v395, %v392
        %v399 = vadd.f32 %v374, 1.0
        %v400 = vlog2.pop %v399
        %v401 = vmul.f32 %v400, 0.6931472
        %v402 = vmul.f32 -0.5, %v374
        %v403 = vadd.f32 %v402, 1.0
        %v404 = vmul.f32 %v403, %v374
        %v405 = vand.u32 2147483647, %v374
        %vm406 = vcmp.lt.f32.partialorder %v405, 0.0004427343
        %v407 = vsel %vm406, %v404, %v401
        %v408 = vadd.f32 %v376, 1.0
        %v409 = vlog2.pop %v408
        %v410 = vmul.f32 %v409, 0.6931472
        %v411 = vmul.f32 -0.5, %v376
        %v412 = vadd.f32 %v411, 1.0
        %v413 = vmul.f32 %v412, %v376
        %v414 = vand.u32 2147483647, %v376
        %vm415 = vcmp.lt.f32.partialorder %v414, 0.0004427343
        %v416 = vsel %vm415, %v413, %v410
        %v417 = vadd.f32 %v377, %v389
        %v418 = vadd.f32 %v378, %v398
        %v419 = vadd.f32 %v379, %v407
        %v420 = vadd.f32 %v380, %v416
        %v421 = vmul.f32 %v357, 9.0
        %v422 = vmul.f32 %v358, 9.0
        %v423 = vmul.f32 %v359, 9.0
        %v424 = vmul.f32 %v360, 9.0
        %v425 = vadd.f32 %v421, 1.0
        %v426 = vadd.f32 %v422, 1.0
        %v427 = vadd.f32 %v423, 1.0
        %v428 = vadd.f32 %v424, 1.0
        %v429 = vmul.f32 %v417, %v425
        %v430 = vmul.f32 %v418, %v426
        %v431 = vmul.f32 %v419, %v427
        %v432 = vmul.f32 %v420, %v428
        %v433 = vmul.f32 %v357, %v352
        %v434 = vmul.f32 %v358, %v353
        %v435 = vmul.f32 %v359, %v354
        %v436 = vmul.f32 %v360, %v355
        %v437 = vmul.f32 %v433, 10.0
        %v438 = vmul.f32 %v434, 10.0
        %v439 = vmul.f32 %v435, 10.0
        %v440 = vmul.f32 %v436, 10.0
        %v441 = vsub.f32 %v429, %v437
        %v442 = vsub.f32 %v430, %v438
        %v443 = vsub.f32 %v431, %v439
        %v444 = vsub.f32 %v432, %v440
        %v445 = vadd.f32 %v370, 1.0
        %v446 = vadd.f32 %v372, 1.0
        %v447 = vadd.f32 %v374, 1.0
        %v448 = vadd.f32 %v376, 1.0
        %v449 = vrcp.pop %v445
        %v450 = vrcp.pop %v446
        %v451 = vrcp.pop %v447
        %v452 = vrcp.pop %v448
        %vm453 = vcmp.ge.f32.partialorder %v352, 0.0
        %vm454 = vcmp.ge.f32.partialorder %v353, 0.0
        %vm455 = vcmp.ge.f32.partialorder %v354, 0.0
        %vm456 = vcmp.ge.f32.partialorder %v355, 0.0
        %v457 = vmul.f32 %v370, %v449
        %v458 = vmul.f32 %v372, %v450
        %v459 = vmul.f32 %v374, %v451
        %v460 = vmul.f32 %v376, %v452
        %v461 = vsel %vm453, %v449, %v457
        %v462 = vsel %vm454, %v450, %v458
        %v463 = vsel %vm455, %v451, %v459
        %v464 = vsel %vm456, %v452, %v460
        %s465 = sadd.s32 %s210, 1
        %p466 = scmp.lt.s32.totalorder %s465, 8
        %v467 = vadd.f32 %v441, %v442
        %v468 = vadd.f32 %v467, %v443
        %v469 = vadd.f32 %v468, %v444
        %s470 = scalar_select %p466, 1, 0
        %v471 = vstv %s470
        %vm472 = vcmp.eq.s32.totalorder %v471, 1
        %v473 = vsel %vm472, %v469, 0.0
        %v474 = vadd.f32 %v331, %v473
        %v475 = vmul.f32 %v461, %v357
        %v476 = vmul.f32 %v462, %v358
        %v477 = vmul.f32 %v463, %v359
        %v478 = vmul.f32 %v464, %v360
        %v479 = vadd.f32 %v475, %v476
        %v480 = vadd.f32 %v479, %v477
        %v481 = vadd.f32 %v480, %v478
        %v482 = vsel %vm472, %v481, 0.0
        %v483 = vadd.f32 %v340, %v482
        %v484 = vadd.f32 %v461, %v462
        %v485 = vadd.f32 %v484, %v463
        %v486 = vadd.f32 %v485, %v464
        %v487 = vsel %vm472, %v486, 0.0
        %v488 = vadd.f32 %v345, %v487
        %v489 = vadd.f32 %v357, %v358
        %v490 = vadd.f32 %v489, %v359
        %v491 = vadd.f32 %v490, %v360
        %v492 = vsel %vm472, %v491, 0.0
        %v493 = vadd.f32 %v350, %v492
        %s494 = scalar_lea.vmem %s171, 64 [#allocation2]
        %v495 = vld [vmem:[%s494] sm:$0xff]
        %v496 = vld [vmem:[%s494 + $0x8] sm:$0xff]
        %v497 = vld [vmem:[%s494 + $0x10] sm:$0xff]
        %v498 = vld [vmem:[%s494 + $0x18] sm:$0xff]
        %s499 = scalar_lea.vmem %s181, 64 [#allocation5]
        %v500 = vld [vmem:[%s499] sm:$0xff]
        %v501 = vld [vmem:[%s499 + $0x8] sm:$0xff]
        %v502 = vld [vmem:[%s499 + $0x10] sm:$0xff]
        %v503 = vld [vmem:[%s499 + $0x18] sm:$0xff]
        %v504 = vand.u32 2147483647, %v495
        %v505 = vand.u32 2147483647, %v496
        %v506 = vand.u32 2147483647, %v497
        %v507 = vand.u32 2147483647, %v498
        %v508 = vsub.f32 0.0, %v504
        %v509 = vsub.f32 0.0, %v505
        %v510 = vsub.f32 0.0, %v506
        %v511 = vsub.f32 0.0, %v507
        %v512 = vmul.f32 %v508, 1.442695
        %v513 = vpow.pop %v512
        %v514 = vmul.f32 %v509, 1.442695
        %v515 = vpow.pop %v514
        %v516 = vmul.f32 %v510, 1.442695
        %v517 = vpow.pop %v516
        %v518 = vmul.f32 %v511, 1.442695
        %v519 = vpow.pop %v518
        %v520 = vmax.f32 %v495, 0.0
        %v521 = vmax.f32 %v496, 0.0
        %v522 = vmax.f32 %v497, 0.0
        %v523 = vmax.f32 %v498, 0.0
        %v524 = vadd.f32 %v513, 1.0
        %v525 = vlog2.pop %v524
        %v526 = vmul.f32 %v525, 0.6931472
        %v527 = vmul.f32 -0.5, %v513
        %v528 = vadd.f32 %v527, 1.0
        %v529 = vmul.f32 %v528, %v513
        %v530 = vand.u32 2147483647, %v513
        %vm531 = vcmp.lt.f32.partialorder %v530, 0.0004427343
        %v532 = vsel %vm531, %v529, %v526
        %v533 = vadd.f32 %v515, 1.0
        %v534 = vlog2.pop %v533
        %v535 = vmul.f32 %v534, 0.6931472
        %v536 = vmul.f32 -0.5, %v515
        %v537 = vadd.f32 %v536, 1.0
        %v538 = vmul.f32 %v537, %v515
        %v539 = vand.u32 2147483647, %v515
        %vm540 = vcmp.lt.f32.partialorder %v539, 0.0004427343
        %v541 = vsel %vm540, %v538, %v535
        %v542 = vadd.f32 %v517, 1.0
        %v543 = vlog2.pop %v542
        %v544 = vmul.f32 %v543, 0.6931472
        %v545 = vmul.f32 -0.5, %v517
        %v546 = vadd.f32 %v545, 1.0
        %v547 = vmul.f32 %v546, %v517
        %v548 = vand.u32 2147483647, %v517
        %vm549 = vcmp.lt.f32.partialorder %v548, 0.0004427343
        %v550 = vsel %vm549, %v547, %v544
        %v551 = vadd.f32 %v519, 1.0
        %v552 = vlog2.pop %v551
        %v553 = vmul.f32 %v552, 0.6931472
        %v554 = vmul.f32 -0.5, %v519
        %v555 = vadd.f32 %v554, 1.0
        %v556 = vmul.f32 %v555, %v519
        %v557 = vand.u32 2147483647, %v519
        %vm558 = vcmp.lt.f32.partialorder %v557, 0.0004427343
        %v559 = vsel %vm558, %v556, %v553
        %v560 = vadd.f32 %v520, %v532
        %v561 = vadd.f32 %v521, %v541
        %v562 = vadd.f32 %v522, %v550
        %v563 = vadd.f32 %v523, %v559
        %v564 = vmul.f32 %v500, 9.0
        %v565 = vmul.f32 %v501, 9.0
        %v566 = vmul.f32 %v502, 9.0
        %v567 = vmul.f32 %v503, 9.0
        %v568 = vadd.f32 %v564, 1.0
        %v569 = vadd.f32 %v565, 1.0
        %v570 = vadd.f32 %v566, 1.0
        %v571 = vadd.f32 %v567, 1.0
        %v572 = vmul.f32 %v560, %v568
        %v573 = vmul.f32 %v561, %v569
        %v574 = vmul.f32 %v562, %v570
        %v575 = vmul.f32 %v563, %v571
        %v576 = vmul.f32 %v500, %v495
        %v577 = vmul.f32 %v501, %v496
        %v578 = vmul.f32 %v502, %v497
        %v579 = vmul.f32 %v503, %v498
        %v580 = vmul.f32 %v576, 10.0
        %v581 = vmul.f32 %v577, 10.0
        %v582 = vmul.f32 %v578, 10.0
        %v583 = vmul.f32 %v579, 10.0
        %v584 = vsub.f32 %v572, %v580
        %v585 = vsub.f32 %v573, %v581
        %v586 = vsub.f32 %v574, %v582
        %v587 = vsub.f32 %v575, %v583
        %v588 = vadd.f32 %v513, 1.0
        %v589 = vadd.f32 %v515, 1.0
        %v590 = vadd.f32 %v517, 1.0
        %v591 = vadd.f32 %v519, 1.0
        %v592 = vrcp.pop %v588
        %v593 = vrcp.pop %v589
        %v594 = vrcp.pop %v590
        %v595 = vrcp.pop %v591
        %vm596 = vcmp.ge.f32.partialorder %v495, 0.0
        %vm597 = vcmp.ge.f32.partialorder %v496, 0.0
        %vm598 = vcmp.ge.f32.partialorder %v497, 0.0
        %vm599 = vcmp.ge.f32.partialorder %v498, 0.0
        %v600 = vmul.f32 %v513, %v592
        %v601 = vmul.f32 %v515, %v593
        %v602 = vmul.f32 %v517, %v594
        %v603 = vmul.f32 %v519, %v595
        %v604 = vsel %vm596, %v592, %v600
        %v605 = vsel %vm597, %v593, %v601
        %v606 = vsel %vm598, %v594, %v602
        %v607 = vsel %vm599, %v595, %v603
        %s608 = sadd.s32 %s210, 2
        %p609 = scmp.lt.s32.totalorder %s608, 8
        %v610 = vadd.f32 %v584, %v585
        %v611 = vadd.f32 %v610, %v586
        %v612 = vadd.f32 %v611, %v587
        %s613 = scalar_select %p609, 1, 0
        %v614 = vstv %s613
        %vm615 = vcmp.eq.s32.totalorder %v614, 1
        %v616 = vsel %vm615, %v612, 0.0
        %v617 = vadd.f32 %v474, %v616
        %v618 = vmul.f32 %v604, %v500
        %v619 = vmul.f32 %v605, %v501
        %v620 = vmul.f32 %v606, %v502
        %v621 = vmul.f32 %v607, %v503
        %v622 = vadd.f32 %v618, %v619
        %v623 = vadd.f32 %v622, %v620
        %v624 = vadd.f32 %v623, %v621
        %v625 = vsel %vm615, %v624, 0.0
        %v626 = vadd.f32 %v483, %v625
        %v627 = vadd.f32 %v604, %v605
        %v628 = vadd.f32 %v627, %v606
        %v629 = vadd.f32 %v628, %v607
        %v630 = vsel %vm615, %v629, 0.0
        %v631 = vadd.f32 %v488, %v630
        %v632 = vadd.f32 %v500, %v501
        %v633 = vadd.f32 %v632, %v502
        %v634 = vadd.f32 %v633, %v503
        %v635 = vsel %vm615, %v634, 0.0
        %v636 = vadd.f32 %v493, %v635
        %s637 = scalar_lea.vmem %s171, 96 [#allocation2]
        %v638 = vld [vmem:[%s637] sm:$0xff]
        %v639 = vld [vmem:[%s637 + $0x8] sm:$0xff]
        %v640 = vld [vmem:[%s637 + $0x10] sm:$0xff]
        %v641 = vld [vmem:[%s637 + $0x18] sm:$0xff]
        %s642 = scalar_lea.vmem %s181, 96 [#allocation5]
        %v643 = vld [vmem:[%s642] sm:$0xff]
        %v644 = vld [vmem:[%s642 + $0x8] sm:$0xff]
        %v645 = vld [vmem:[%s642 + $0x10] sm:$0xff]
        %v646 = vld [vmem:[%s642 + $0x18] sm:$0xff]
        %v647 = vand.u32 2147483647, %v638
        %v648 = vand.u32 2147483647, %v639
        %v649 = vand.u32 2147483647, %v640
        %v650 = vand.u32 2147483647, %v641
        %v651 = vsub.f32 0.0, %v647
        %v652 = vsub.f32 0.0, %v648
        %v653 = vsub.f32 0.0, %v649
        %v654 = vsub.f32 0.0, %v650
        %v655 = vmul.f32 %v651, 1.442695
        %v656 = vpow.pop %v655
        %v657 = vmul.f32 %v652, 1.442695
        %v658 = vpow.pop %v657
        %v659 = vmul.f32 %v653, 1.442695
        %v660 = vpow.pop %v659
        %v661 = vmul.f32 %v654, 1.442695
        %v662 = vpow.pop %v661
        %v663 = vmax.f32 %v638, 0.0
        %v664 = vmax.f32 %v639, 0.0
        %v665 = vmax.f32 %v640, 0.0
        %v666 = vmax.f32 %v641, 0.0
        %v667 = vadd.f32 %v656, 1.0
        %v668 = vlog2.pop %v667
        %v669 = vmul.f32 %v668, 0.6931472
        %v670 = vmul.f32 -0.5, %v656
        %v671 = vadd.f32 %v670, 1.0
        %v672 = vmul.f32 %v671, %v656
        %v673 = vand.u32 2147483647, %v656
        %vm674 = vcmp.lt.f32.partialorder %v673, 0.0004427343
        %v675 = vsel %vm674, %v672, %v669
        %v676 = vadd.f32 %v658, 1.0
        %v677 = vlog2.pop %v676
        %v678 = vmul.f32 %v677, 0.6931472
        %v679 = vmul.f32 -0.5, %v658
        %v680 = vadd.f32 %v679, 1.0
        %v681 = vmul.f32 %v680, %v658
        %v682 = vand.u32 2147483647, %v658
        %vm683 = vcmp.lt.f32.partialorder %v682, 0.0004427343
        %v684 = vsel %vm683, %v681, %v678
        %v685 = vadd.f32 %v660, 1.0
        %v686 = vlog2.pop %v685
        %v687 = vmul.f32 %v686, 0.6931472
        %v688 = vmul.f32 -0.5, %v660
        %v689 = vadd.f32 %v688, 1.0
        %v690 = vmul.f32 %v689, %v660
        %v691 = vand.u32 2147483647, %v660
        %vm692 = vcmp.lt.f32.partialorder %v691, 0.0004427343
        %v693 = vsel %vm692, %v690, %v687
        %v694 = vadd.f32 %v662, 1.0
        %v695 = vlog2.pop %v694
        %v696 = vmul.f32 %v695, 0.6931472
        %v697 = vmul.f32 -0.5, %v662
        %v698 = vadd.f32 %v697, 1.0
        %v699 = vmul.f32 %v698, %v662
        %v700 = vand.u32 2147483647, %v662
        %vm701 = vcmp.lt.f32.partialorder %v700, 0.0004427343
        %v702 = vsel %vm701, %v699, %v696
        %v703 = vadd.f32 %v663, %v675
        %v704 = vadd.f32 %v664, %v684
        %v705 = vadd.f32 %v665, %v693
        %v706 = vadd.f32 %v666, %v702
        %v707 = vmul.f32 %v643, 9.0
        %v708 = vmul.f32 %v644, 9.0
        %v709 = vmul.f32 %v645, 9.0
        %v710 = vmul.f32 %v646, 9.0
        %v711 = vadd.f32 %v707, 1.0
        %v712 = vadd.f32 %v708, 1.0
        %v713 = vadd.f32 %v709, 1.0
        %v714 = vadd.f32 %v710, 1.0
        %v715 = vmul.f32 %v703, %v711
        %v716 = vmul.f32 %v704, %v712
        %v717 = vmul.f32 %v705, %v713
        %v718 = vmul.f32 %v706, %v714
        %v719 = vmul.f32 %v643, %v638
        %v720 = vmul.f32 %v644, %v639
        %v721 = vmul.f32 %v645, %v640
        %v722 = vmul.f32 %v646, %v641
        %v723 = vmul.f32 %v719, 10.0
        %v724 = vmul.f32 %v720, 10.0
        %v725 = vmul.f32 %v721, 10.0
        %v726 = vmul.f32 %v722, 10.0
        %v727 = vsub.f32 %v715, %v723
        %v728 = vsub.f32 %v716, %v724
        %v729 = vsub.f32 %v717, %v725
        %v730 = vsub.f32 %v718, %v726
        %v731 = vadd.f32 %v656, 1.0
        %v732 = vadd.f32 %v658, 1.0
        %v733 = vadd.f32 %v660, 1.0
        %v734 = vadd.f32 %v662, 1.0
        %v735 = vrcp.pop %v731
        %v736 = vrcp.pop %v732
        %v737 = vrcp.pop %v733
        %v738 = vrcp.pop %v734
        %vm739 = vcmp.ge.f32.partialorder %v638, 0.0
        %vm740 = vcmp.ge.f32.partialorder %v639, 0.0
        %vm741 = vcmp.ge.f32.partialorder %v640, 0.0
        %vm742 = vcmp.ge.f32.partialorder %v641, 0.0
        %v743 = vmul.f32 %v656, %v735
        %v744 = vmul.f32 %v658, %v736
        %v745 = vmul.f32 %v660, %v737
        %v746 = vmul.f32 %v662, %v738
        %v747 = vsel %vm739, %v735, %v743
        %v748 = vsel %vm740, %v736, %v744
        %v749 = vsel %vm741, %v737, %v745
        %v750 = vsel %vm742, %v738, %v746
        %s751 = sadd.s32 %s210, 3
        %p752 = scmp.lt.s32.totalorder %s751, 8
        %v753 = vadd.f32 %v727, %v728
        %v754 = vadd.f32 %v753, %v729
        %v755 = vadd.f32 %v754, %v730
        %s756 = scalar_select %p752, 1, 0
        %v757 = vstv %s756
        %vm758 = vcmp.eq.s32.totalorder %v757, 1
        %v759 = vsel %vm758, %v755, 0.0
        %v760 = vadd.f32 %v617, %v759
        %v761 = vmul.f32 %v747, %v643
        %v762 = vmul.f32 %v748, %v644
        %v763 = vmul.f32 %v749, %v645
        %v764 = vmul.f32 %v750, %v646
        %v765 = vadd.f32 %v761, %v762
        %v766 = vadd.f32 %v765, %v763
        %v767 = vadd.f32 %v766, %v764
        %v768 = vsel %vm758, %v767, 0.0
        %v769 = vadd.f32 %v626, %v768
        %v770 = vadd.f32 %v747, %v748
        %v771 = vadd.f32 %v770, %v749
        %v772 = vadd.f32 %v771, %v750
        %v773 = vsel %vm758, %v772, 0.0
        %v774 = vadd.f32 %v631, %v773
        %v775 = vadd.f32 %v643, %v644
        %v776 = vadd.f32 %v775, %v645
        %v777 = vadd.f32 %v776, %v646
        %v778 = vsel %vm758, %v777, 0.0
        %v779 = vadd.f32 %v636, %v778
        %780 = vst [vmem:[%s207] sm:$0xff] %v760
        %s781 = scalar_lea.vmem %s207, 8 [#allocation7]
        %782 = vst [vmem:[%s781] sm:$0xff] %v769
        %s783 = scalar_lea.vmem %s207, 16 [#allocation7]
        %784 = vst [vmem:[%s783] sm:$0xff] %v774
        %s785 = scalar_lea.vmem %s207, 24 [#allocation7]
        %786 = vst [vmem:[%s785] sm:$0xff] %v779
        %s787 = sand.u32 %s82, 1
        %s788 = scalar_lea.sflag [#allocation4], %s787
        %s789 = sand.u32 %s82, 1
        %s790 = smul.addr %s789, 32
        %s791 = scalar_lea.vmem [#allocation7], %s790
        // Predicated region
        $region37: #{tpu_custom_call.1} parent=27 // pred_check
          %p792 = pneg %p92
        $region38: #{tpu_custom_call.1} parent=27 // pred_check_branch
          %794 = sbr.rel (%p792) target = $region40
        $region39: #{tpu_custom_call.1} parent=27 // pred_region
          %796 = vsyncadd %s788, 0
          %s797 = smul.addr %s22, 4
          %s798 = smul.addr %s797, 8
          %s799 = scalar_lea.hbm %s2, %s798
          %s800 = sshll.u32 %s791, 4
          %s801 = int_to_ptr.vmem [resolvable:$true] %s800
          %s802 = sshll.u32 %s799, 4
          %s803 = int_to_ptr.hbm [resolvable:$true] %s802
          %808 = dma.vmem_to_hbm [thread:$0]  %s801, 512, %s803, %s788, 128, 128, 8
        $region40: #{tpu_custom_call.1} parent=27 // pred_fallthru
          _
      $region28: #{tpu_custom_call.1} parent=5 // pred_fallthru
        _
      %p809 = scmp.le.s32.totalorder 2, %s17
      // Predicated region
      $region41: #{tpu_custom_call.1} parent=5 // pred_check
        %p810 = pneg %p809
      $region42: #{tpu_custom_call.1} parent=5 // pred_check_branch
        %812 = sbr.rel (%p810) target = $region44
      $region43: #{tpu_custom_call.1} parent=5 // pred_region
        %s813 = ssub.s32 %s17, 2
        // Predicated region
        $region45: #{tpu_custom_call.1} parent=43 // pred_check
          %p814 = pneg %p98
        $region46: #{tpu_custom_call.1} parent=43 // pred_check_branch
          %816 = sbr.rel (%p814) target = $region48
        $region47: #{tpu_custom_call.1} parent=43 // pred_region
          %s817 = sand.u32 %s83, 1
          %s818 = scalar_lea.sflag [#allocation4], %s817
          %s819 = sand.u32 %s83, 1
          %s820 = smul.addr %s819, 32
          %s821 = scalar_lea.vmem [#allocation7], %s820
          %823 = dma.done %s818, 512
        $region48: #{tpu_custom_call.1} parent=43 // pred_fallthru
          _
      $region44: #{tpu_custom_call.1} parent=5 // pred_fallthru
        _
    $region6: #{tpu_custom_call.1} parent=1 // loop_footer
      %s21 = sadd.s32 1, %s17
    $region7: #{tpu_custom_call.1} parent=1 // loop_footer_branch
      %16 = sbr.rel target = $region3
    $region8: #{tpu_custom_call.1} parent=1 // loop_exit
      _
    %824 = vsyncpa [#allocation3], 1
    %s825 = scalar_lea.sflag [#allocation3], 1
    %826 = vsyncpa %s825, 1
    %827 = vsyncpa [#allocation6], 1
    %s828 = scalar_lea.sflag [#allocation6], 1
    %829 = vsyncpa %s828, 1
    %830 = vsyncpa [#allocation4], 1
    %s831 = scalar_lea.sflag [#allocation4], 1
    %832 = vsyncpa %s831, 1

</llo_original>
